<compile_context>
chip_gen: v6e
topology: v6e:2x2x1
jax: 0.10.0
libtpu: 0.0.40
codegen_flags: <defaults>
</compile_context>

<pallas_src>
import functools

import jax
import jax.numpy as jnp
from jax.experimental import pallas as pl
from jax.experimental.pallas import tpu as pltpu

EPS = 0.8          # nn.BatchNorm1d(out_size, 0.8) -> eps = 0.8
NEG_SLOPE = 0.2    # LeakyReLU(0.2)


def block_kernel(x_ref, w_ref, b_ref, gamma_ref, beta_ref, o_ref, *, norm, batch):
    x = x_ref[...]                                   # [B, in]   (native dtype)
    w = w_ref[...]                                   # [TN, in]  (PyTorch layout tile)
    gamma = gamma_ref[...].astype(jnp.float32)       # [1, TN]
    beta = beta_ref[...].astype(jnp.float32)         # [1, TN]

    # Linear: contract on in_features directly against the [out, in] layout
    # (no transposed copy of the weight), f32 accumulation on the MXU.
    y = jax.lax.dot_general(
        x, w, (((1,), (1,)), ((), ())),
        preferred_element_type=jnp.float32)          # [B, TN] f32

    inv_b = 1.0 / batch

    def bn(v):
        # One-pass fused BatchNorm: biased batch stats -> scale/shift epilogue.
        s1 = jnp.sum(v, axis=0, keepdims=True) * inv_b           # mean
        s2 = jnp.sum(v * v, axis=0, keepdims=True) * inv_b       # E[v^2]
        var = s2 - s1 * s1
        scale = gamma * jax.lax.rsqrt(var + EPS)
        shift = beta - s1 * scale
        return v * scale + shift

    if norm:
        # Linear bias is mathematically cancelled by the BN mean subtraction.
        y = bn(y)
    else:
        y = y + b_ref[...].astype(jnp.float32)

    # LeakyReLU(0.2)
    y = jnp.where(y >= 0, y, NEG_SLOPE * y)

    # Final BatchNorm (always applied in the reference forward)
    y = bn(y)

    o_ref[...] = y.astype(o_ref.dtype)


def block_forward(x, weight, bias, gamma, beta, *, norm=True, tn=128):
    """x: [B, in], weight: [out, in] (PyTorch layout), bias/gamma/beta: [out]."""
    B, in_f = x.shape
    out_f = weight.shape[0]

    # Pad out_features to a lane-dense multiple of the feature tile.
    out_p = pl.cdiv(out_f, tn) * tn
    pad = out_p - out_f
    if pad:
        weight = jnp.pad(weight, ((0, pad), (0, 0)))
        bias = jnp.pad(bias, (0, pad))
        gamma = jnp.pad(gamma, (0, pad))
        beta = jnp.pad(beta, (0, pad))

    b2 = bias.reshape(1, out_p)
    g2 = gamma.reshape(1, out_p)
    be2 = beta.reshape(1, out_p)

    kernel = functools.partial(block_kernel, norm=norm, batch=float(B))

    out = pl.pallas_call(
        kernel,
        out_shape=jax.ShapeDtypeStruct((B, out_p), jnp.float32),
        grid_spec=pltpu.PrefetchScalarGridSpec(
            num_scalar_prefetch=0,
            grid=(out_p // tn,),
            in_specs=[
                pl.BlockSpec((B, in_f), lambda j: (0, 0)),     # x: full, resident
                pl.BlockSpec((tn, in_f), lambda j: (j, 0)),    # weight tile [TN, in]
                pl.BlockSpec((1, tn), lambda j: (0, j)),       # bias
                pl.BlockSpec((1, tn), lambda j: (0, j)),       # gamma
                pl.BlockSpec((1, tn), lambda j: (0, j)),       # beta
            ],
            out_specs=pl.BlockSpec((B, tn), lambda j: (0, j)),
        ),
        compiler_params=pltpu.CompilerParams(
            dimension_semantics=("parallel",),   # shard feature tiles across TCs
            vmem_limit_bytes=64 << 20,
        ),
    )(x, weight, b2, g2, be2)

    return out[:, :out_f] if pad else out


def block_forward_ref(x, weight, bias, gamma, beta, *, norm=True):
    """Pure-JAX reference matching PyTorch training-mode forward."""
    y = x @ weight.T + bias

    def bn(v):
        m = jnp.mean(v, axis=0, keepdims=True)
        va = jnp.mean((v - m) ** 2, axis=0, keepdims=True)
        return (v - m) / jnp.sqrt(va + EPS) * gamma + beta

    if norm:
        y = bn(y)
    y = jnp.where(y >= 0, y, NEG_SLOPE * y)
    return bn(y)


if __name__ == "__main__":
    B, IN_F, OUT_F = 8, 32, 64

    key = jax.random.PRNGKey(0)
    kx, kw, kb, kg, kbe = jax.random.split(key, 5)

    x = jax.random.normal(kx, (B, IN_F), dtype=jnp.float32)
    # nn.Linear params (deterministic synthetic init, PyTorch layout [out, in])
    weight = jax.random.uniform(kw, (OUT_F, IN_F), jnp.float32, -0.1, 0.1)
    bias = jax.random.uniform(kb, (OUT_F,), jnp.float32, -0.1, 0.1)
    # nn.BatchNorm1d affine params
    gamma = 1.0 + 0.05 * jax.random.normal(kg, (OUT_F,), dtype=jnp.float32)
    beta = 0.05 * jax.random.normal(kbe, (OUT_F,), dtype=jnp.float32)

    # norm=True path
    out = block_forward(x, weight, bias, gamma, beta, norm=True)
    out = jax.block_until_ready(out)
    ref = block_forward_ref(x, weight, bias, gamma, beta, norm=True)
    assert out.shape == (B, OUT_F)
    assert jnp.allclose(out, ref, atol=1e-4, rtol=1e-4), "mismatch (norm=True)"

    # norm=False path (bias actually used)
    out_nf = block_forward(x, weight, bias, gamma, beta, norm=False)
    out_nf = jax.block_until_ready(out_nf)
    ref_nf = block_forward_ref(x, weight, bias, gamma, beta, norm=False)
    assert jnp.allclose(out_nf, ref_nf, atol=1e-4, rtol=1e-4), "mismatch (norm=False)"

    print("KERNEL_OK")
</pallas_src>

<mosaic_0001>
module attributes {stable_mosaic.version = 11 : i64} {
  func.func @block_kernel(%arg0: i32, %arg1: memref<8x32xf32, #tpu.memory_space<vmem>>, %arg2: memref<128x32xf32, #tpu.memory_space<vmem>>, %arg3: memref<1x128xf32, #tpu.memory_space<vmem>>, %arg4: memref<1x128xf32, #tpu.memory_space<vmem>>, %arg5: memref<1x128xf32, #tpu.memory_space<vmem>>, %arg6: memref<8x128xf32, #tpu.memory_space<vmem>>) attributes {dimension_semantics = [#tpu.dimension_semantics<parallel>], iteration_bounds = array<i64: 1>, scalar_prefetch = 0 : i64, scratch_operands = 0 : i64, tpu.core_type = #tpu.core_type<tc>, window_params = [{pipeline_mode = #tpu.pipeline_mode<synchronous>, transform_indices = @transform_0, window_bounds = array<i64: 8, 32>}, {transform_indices = @transform_1, window_bounds = array<i64: 128, 32>}, {transform_indices = @transform_2, window_bounds = array<i64: 1, 128>}, {transform_indices = @transform_3, window_bounds = array<i64: 1, 128>}, {transform_indices = @transform_4, window_bounds = array<i64: 1, 128>}, {transform_indices = @transform_5, window_bounds = array<i64: 8, 128>}]} {
    %c0 = arith.constant 0 : index
    %c0_0 = arith.constant 0 : index
    %0 = vector.load %arg1[%c0, %c0_0] : memref<8x32xf32, #tpu.memory_space<vmem>>, vector<8x32xf32>
    %c0_1 = arith.constant 0 : index
    %c0_2 = arith.constant 0 : index
    %1 = vector.load %arg2[%c0_1, %c0_2] : memref<128x32xf32, #tpu.memory_space<vmem>>, vector<128x32xf32>
    %c0_3 = arith.constant 0 : index
    %c0_4 = arith.constant 0 : index
    %2 = vector.load %arg4[%c0_3, %c0_4] : memref<1x128xf32, #tpu.memory_space<vmem>>, vector<1x128xf32>
    %c0_5 = arith.constant 0 : index
    %c0_6 = arith.constant 0 : index
    %3 = vector.load %arg5[%c0_5, %c0_6] : memref<1x128xf32, #tpu.memory_space<vmem>>, vector<1x128xf32>
    %cst = arith.constant dense<0.000000e+00> : vector<8x128xf32>
    %4 = tpu.matmul %0, %1, %cst {dimension_numbers = #tpu.dot_dimension_numbers<[1], [1], [0], [0], [0, 0, 1, 0], [], []>} : vector<8x32xf32>, vector<128x32xf32>, vector<8x128xf32> -> vector<8x128xf32>
    %cst_7 = arith.constant dense<0.000000e+00> : vector<128xf32>
    %5 = vector.multi_reduction <add>, %4, %cst_7 [0] : vector<8x128xf32> to vector<128xf32>
    %6 = vector.shape_cast %5 : vector<128xf32> to vector<1x128xf32>
    %cst_8 = arith.constant 1.250000e-01 : f32
    %7 = vector.broadcast %cst_8 : f32 to vector<1x128xf32>
    %8 = arith.mulf %6, %7 : vector<1x128xf32>
    %9 = arith.mulf %4, %4 : vector<8x128xf32>
    %cst_9 = arith.constant dense<0.000000e+00> : vector<128xf32>
    %10 = vector.multi_reduction <add>, %9, %cst_9 [0] : vector<8x128xf32> to vector<128xf32>
    %11 = vector.shape_cast %10 : vector<128xf32> to vector<1x128xf32>
    %cst_10 = arith.constant 1.250000e-01 : f32
    %12 = vector.broadcast %cst_10 : f32 to vector<1x128xf32>
    %13 = arith.mulf %11, %12 : vector<1x128xf32>
    %14 = arith.mulf %8, %8 : vector<1x128xf32>
    %15 = arith.subf %13, %14 : vector<1x128xf32>
    %cst_11 = arith.constant 8.000000e-01 : f32
    %16 = vector.broadcast %cst_11 : f32 to vector<1x128xf32>
    %17 = arith.addf %15, %16 : vector<1x128xf32>
    %18 = math.rsqrt %17 : vector<1x128xf32>
    %19 = arith.mulf %2, %18 : vector<1x128xf32>
    %20 = arith.mulf %8, %19 : vector<1x128xf32>
    %21 = arith.subf %3, %20 : vector<1x128xf32>
    %22 = vector.broadcast %19 : vector<1x128xf32> to vector<8x128xf32>
    %23 = arith.mulf %4, %22 : vector<8x128xf32>
    %24 = vector.broadcast %21 : vector<1x128xf32> to vector<8x128xf32>
    %25 = arith.addf %23, %24 : vector<8x128xf32>
    %cst_12 = arith.constant 0.000000e+00 : f32
    %26 = vector.broadcast %cst_12 : f32 to vector<8x128xf32>
    %27 = arith.cmpf oge, %25, %26 : vector<8x128xf32>
    %cst_13 = arith.constant 2.000000e-01 : f32
    %28 = vector.broadcast %cst_13 : f32 to vector<8x128xf32>
    %29 = arith.mulf %28, %25 : vector<8x128xf32>
    %30 = arith.select %27, %25, %29 : vector<8x128xi1>, vector<8x128xf32>
    %cst_14 = arith.constant dense<0.000000e+00> : vector<128xf32>
    %31 = vector.multi_reduction <add>, %30, %cst_14 [0] : vector<8x128xf32> to vector<128xf32>
    %32 = vector.shape_cast %31 : vector<128xf32> to vector<1x128xf32>
    %cst_15 = arith.constant 1.250000e-01 : f32
    %33 = vector.broadcast %cst_15 : f32 to vector<1x128xf32>
    %34 = arith.mulf %32, %33 : vector<1x128xf32>
    %35 = arith.mulf %30, %30 : vector<8x128xf32>
    %cst_16 = arith.constant dense<0.000000e+00> : vector<128xf32>
    %36 = vector.multi_reduction <add>, %35, %cst_16 [0] : vector<8x128xf32> to vector<128xf32>
    %37 = vector.shape_cast %36 : vector<128xf32> to vector<1x128xf32>
    %cst_17 = arith.constant 1.250000e-01 : f32
    %38 = vector.broadcast %cst_17 : f32 to vector<1x128xf32>
    %39 = arith.mulf %37, %38 : vector<1x128xf32>
    %40 = arith.mulf %34, %34 : vector<1x128xf32>
    %41 = arith.subf %39, %40 : vector<1x128xf32>
    %cst_18 = arith.constant 8.000000e-01 : f32
    %42 = vector.broadcast %cst_18 : f32 to vector<1x128xf32>
    %43 = arith.addf %41, %42 : vector<1x128xf32>
    %44 = math.rsqrt %43 : vector<1x128xf32>
    %45 = arith.mulf %2, %44 : vector<1x128xf32>
    %46 = arith.mulf %34, %45 : vector<1x128xf32>
    %47 = arith.subf %3, %46 : vector<1x128xf32>
    %48 = vector.broadcast %45 : vector<1x128xf32> to vector<8x128xf32>
    %49 = arith.mulf %30, %48 : vector<8x128xf32>
    %50 = vector.broadcast %47 : vector<1x128xf32> to vector<8x128xf32>
    %51 = arith.addf %49, %50 : vector<8x128xf32>
    %c0_19 = arith.constant 0 : index
    %c0_20 = arith.constant 0 : index
    %52 = vector.load %arg6[%c0_19, %c0_20] : memref<8x128xf32, #tpu.memory_space<vmem>>, vector<8x128xf32>
    tpu.vector_store %arg6[%c0_19, %c0_20], %51 {strides = array<i32>} : memref<8x128xf32, #tpu.memory_space<vmem>>, vector<8x128xf32>,
    return
  }
  func.func @transform_0(%arg0: i32) -> (i32, i32) {
    %c0_i32 = arith.constant 0 : i32
    %c0_i32_0 = arith.constant 0 : i32
    %c0_i32_1 = arith.constant 0 : i32
    return %c0_i32, %c0_i32_0 : i32, i32
  }
  func.func @transform_1(%arg0: i32) -> (i32, i32) {
    %c0_i32 = arith.constant 0 : i32
    %c0_i32_0 = arith.constant 0 : i32
    return %arg0, %c0_i32 : i32, i32
  }
  func.func @transform_2(%arg0: i32) -> (i32, i32) {
    %c0_i32 = arith.constant 0 : i32
    %c0_i32_0 = arith.constant 0 : i32
    return %c0_i32, %arg0 : i32, i32
  }
  func.func @transform_3(%arg0: i32) -> (i32, i32) {
    %c0_i32 = arith.constant 0 : i32
    %c0_i32_0 = arith.constant 0 : i32
    return %c0_i32, %arg0 : i32, i32
  }
  func.func @transform_4(%arg0: i32) -> (i32, i32) {
    %c0_i32 = arith.constant 0 : i32
    %c0_i32_0 = arith.constant 0 : i32
    return %c0_i32, %arg0 : i32, i32
  }
  func.func @transform_5(%arg0: i32) -> (i32, i32) {
    %c0_i32 = arith.constant 0 : i32
    %c0_i32_0 = arith.constant 0 : i32
    return %c0_i32, %arg0 : i32, i32
  }
}

</mosaic_0001>

<llo_original>
// kernel: tpu_custom_call.1
$region0: #{tpu_custom_call.1}
  #allocation0 [shape = 'u32[]', space=smem, size = 0x4, offset = 0x4, fixed_abs, tag = 'smem constant byte address 0x4 - core index']
  #allocation1 [shape = 'u32[144,128]{1,0:T(1,128)}', space=vmem, size = 0x12000, scoped, tag = 'internal scratch']
  %s0 = inlined_call_operand.vmem [shape: f32[8,32], index: 0, kind: input, shape index: {}]
  %s1 = inlined_call_operand.vmem [shape: f32[128,32], index: 1, kind: input, shape index: {}]
  %s2 = inlined_call_operand.vmem [shape: f32[1,128], index: 2, kind: input, shape index: {}]
  %s3 = inlined_call_operand.vmem [shape: f32[1,128], index: 3, kind: input, shape index: {}]
  %s4 = inlined_call_operand.vmem [shape: f32[1,128], index: 4, kind: input, shape index: {}]
  %s5 = inlined_call_operand.hbm [shape: f32[8,128], index: 5, kind: output, shape index: {}]
  %s6 = sld [smem:[#allocation0]]
  $region30: #{tpu_custom_call.1} parent=0
    _
  %s8 = ssub.s32 1, %s6
  %s9 = scalar_select 0, %s8, %s6
  $region1: #{tpu_custom_call.1} parent=0
    #allocation2 [shape = 'u8[4096]{0}', space=vmem, size = 0x1000, scoped, tag = 'output window, operand 0, single buffered']
    #allocation3 [shape = 's32[1]{0}', space=sflag, size = 0x4, scoped, tag = 'scoped memory for tpu_custom_call.1']
    %10 = vsyncpa [#allocation3], 0
    // Predicated region
    $region2: #{tpu_custom_call.1} parent=1 // pred_check
      _
    $region3: #{tpu_custom_call.1} parent=1 // pred_check_branch
      %12 = sbr.rel (0) target = $region5
    $region4: #{tpu_custom_call.1} parent=1 // pred_region
      _
    $region5: #{tpu_custom_call.1} parent=1 // pred_fallthru
      _
    // Predicated region
    $region6: #{tpu_custom_call.1} parent=1 // pred_check
      _
    $region7: #{tpu_custom_call.1} parent=1 // pred_check_branch
      %14 = sbr.rel (0) target = $region9
    $region8: #{tpu_custom_call.1} parent=1 // pred_region
      _
    $region9: #{tpu_custom_call.1} parent=1 // pred_fallthru
      _
    // Predicated region
    $region10: #{tpu_custom_call.1} parent=1 // pred_check
      _
    $region11: #{tpu_custom_call.1} parent=1 // pred_check_branch
      %16 = sbr.rel (0) target = $region13
    $region12: #{tpu_custom_call.1} parent=1 // pred_region
      _
    $region13: #{tpu_custom_call.1} parent=1 // pred_fallthru
      _
    // Predicated region
    $region14: #{tpu_custom_call.1} parent=1 // pred_check
      _
    $region15: #{tpu_custom_call.1} parent=1 // pred_check_branch
      %18 = sbr.rel (0) target = $region17
    $region16: #{tpu_custom_call.1} parent=1 // pred_region
      _
    $region17: #{tpu_custom_call.1} parent=1 // pred_fallthru
      _
    // Predicated region
    $region18: #{tpu_custom_call.1} parent=1 // pred_check
      _
    $region19: #{tpu_custom_call.1} parent=1 // pred_check_branch
      %20 = sbr.rel (0) target = $region21
    $region20: #{tpu_custom_call.1} parent=1 // pred_region
      _
    $region21: #{tpu_custom_call.1} parent=1 // pred_fallthru
      _
    %v21 = vld [vmem:[%s0] sm:$0xff]
    %v22 = vld [vmem:[%s1] sm:$0xff]
    %v23 = vld [vmem:[%s1 + $0x8] sm:$0xff]
    %v24 = vld [vmem:[%s1 + $0x10] sm:$0xff]
    %v25 = vld [vmem:[%s1 + $0x18] sm:$0xff]
    %v26 = vld [vmem:[%s1 + $0x20] sm:$0xff]
    %v27 = vld [vmem:[%s1 + $0x28] sm:$0xff]
    %v28 = vld [vmem:[%s1 + $0x30] sm:$0xff]
    %v29 = vld [vmem:[%s1 + $0x38] sm:$0xff]
    %v30 = vld [vmem:[%s1 + $0x40] sm:$0xff]
    %v31 = vld [vmem:[%s1 + $0x48] sm:$0xff]
    %v32 = vld [vmem:[%s1 + $0x50] sm:$0xff]
    %v33 = vld [vmem:[%s1 + $0x58] sm:$0xff]
    %v34 = vld [vmem:[%s1 + $0x60] sm:$0xff]
    %v35 = vld [vmem:[%s1 + $0x68] sm:$0xff]
    %v36 = vld [vmem:[%s1 + $0x70] sm:$0xff]
    %v37 = vld [vmem:[%s1 + $0x78] sm:$0xff]
    %v38 = vld [vmem:[%s3] sm:$0x1]
    %v39 = vld [vmem:[%s4] sm:$0x1]
    %vm40 = vcmask 261120
    %v42 = vsel %vm40, %v21, 0
    %v45 = vsel %vm40, %v22, 0
    %v48 = vsel %vm40, %v23, 0
    %v51 = vsel %vm40, %v24, 0
    %v54 = vsel %vm40, %v25, 0
    %v57 = vsel %vm40, %v26, 0
    %v60 = vsel %vm40, %v27, 0
    %v63 = vsel %vm40, %v28, 0
    %v66 = vsel %vm40, %v29, 0
    %v69 = vsel %vm40, %v30, 0
    %v72 = vsel %vm40, %v31, 0
    %v75 = vsel %vm40, %v32, 0
    %v78 = vsel %vm40, %v33, 0
    %v81 = vsel %vm40, %v34, 0
    %v84 = vsel %vm40, %v35, 0
    %v87 = vsel %vm40, %v36, 0
    %v90 = vsel %vm40, %v37, 0
    %92 = vmatprep.subr.mxu0 0.0
    %93 = vmatpush1.xpose.msra.mxu0 %v90
    %94 = vmatprep.subr.mxu0 0.0
    %95 = vmatpush1.xpose.msra.mxu0 %v87
    %96 = vmatprep.subr.mxu0 0.0
    %97 = vmatpush1.xpose.msra.mxu0 %v84
    %98 = vmatprep.subr.mxu0 0.0
    %99 = vmatpush1.xpose.msra.mxu0 %v81
    %100 = vmatprep.subr.mxu0 0.0
    %101 = vmatpush1.xpose.msra.mxu0 %v78
    %102 = vmatprep.subr.mxu0 0.0
    %103 = vmatpush1.xpose.msra.mxu0 %v75
    %104 = vmatprep.subr.mxu0 0.0
    %105 = vmatpush1.xpose.msra.mxu0 %v72
    %106 = vmatprep.subr.mxu0 0.0
    %107 = vmatpush1.xpose.msra.mxu0 %v69
    %108 = vmatprep.subr.mxu0 0.0
    %109 = vmatpush1.xpose.msra.mxu0 %v66
    %110 = vmatprep.subr.mxu0 0.0
    %111 = vmatpush1.xpose.msra.mxu0 %v63
    %112 = vmatprep.subr.mxu0 0.0
    %113 = vmatpush1.xpose.msra.mxu0 %v60
    %114 = vmatprep.subr.mxu0 0.0
    %115 = vmatpush1.xpose.msra.mxu0 %v57
    %116 = vmatprep.subr.mxu0 0.0
    %117 = vmatpush1.xpose.msra.mxu0 %v54
    %118 = vmatprep.subr.mxu0 0.0
    %119 = vmatpush1.xpose.msra.mxu0 %v51
    %120 = vmatprep.subr.mxu0 0.0
    %121 = vmatpush1.xpose.msra.mxu0 %v48
    %122 = vmatprep.subr.mxu0 0.0
    %123 = vmatpush1.xpose.msra.mxu0 %v45
    %124 = vmatprep.subr.mxu0 0.0
    %125 = vmatpush2.xpose.msra.mxu0 0.0
    %126 = vmatprep.subr.mxu0 0.0
    %127 = vmatpush2.xpose.msra.mxu0 0.0
    %128 = vmatprep.subr.mxu0 0.0
    %129 = vmatpush2.xpose.msra.mxu0 0.0
    %130 = vmatprep.subr.mxu0 0.0
    %131 = vmatpush2.xpose.msra.mxu0 0.0
    %132 = vmatprep.subr.mxu0 0.0
    %133 = vmatpush2.xpose.msra.mxu0 0.0
    %134 = vmatprep.subr.mxu0 0.0
    %135 = vmatpush2.xpose.msra.mxu0 0.0
    %136 = vmatprep.subr.mxu0 0.0
    %137 = vmatpush2.xpose.msra.mxu0 0.0
    %138 = vmatprep.subr.mxu0 0.0
    %139 = vmatpush2.xpose.msra.mxu0 0.0
    %140 = vmatprep.subr.mxu0 0.0
    %141 = vmatpush2.xpose.msra.mxu0 0.0
    %142 = vmatprep.subr.mxu0 0.0
    %143 = vmatpush2.xpose.msra.mxu0 0.0
    %144 = vmatprep.subr.mxu0 0.0
    %145 = vmatpush2.xpose.msra.mxu0 0.0
    %146 = vmatprep.subr.mxu0 0.0
    %147 = vmatpush2.xpose.msra.mxu0 0.0
    %148 = vmatprep.subr.mxu0 0.0
    %149 = vmatpush2.xpose.msra.mxu0 0.0
    %150 = vmatprep.subr.mxu0 0.0
    %151 = vmatpush2.xpose.msra.mxu0 0.0
    %152 = vmatprep.subr.mxu0 0.0
    %153 = vmatpush2.xpose.msra.mxu0 0.0
    %154 = vmatprep.subr.mxu0 0.0
    %155 = vmatpush2.xpose.msra.mxu0 0.0
    %156 = vmatprep.mubr.f32.mxu0 0.0
    %157 = vmatmul.mubr.f32.gmra.mxu0 %v42
    %v158 = vpop.f32.mrf.mxu0
    %v159 = vadd.f32 0.0, %v158
    %v160 = vpop.f32.mrf.mxu0
    %161 = vdwg.mxu0
    %v162 = vrot.slane %v159, 4
    %v163 = vadd.f32 %v159, %v162
    %v164 = vrot.slane %v163, 2
    %v165 = vadd.f32 %v163, %v164
    %v166 = vrot.slane %v165, 1
    %v167 = vadd.f32 %v165, %v166
    %v168 = vmul.f32 %v167, 0.125
    %v169 = vmul.f32 %v159, %v159
    %v170 = vrot.slane %v169, 4
    %v171 = vadd.f32 %v169, %v170
    %v172 = vrot.slane %v171, 2
    %v173 = vadd.f32 %v171, %v172
    %v174 = vrot.slane %v173, 1
    %v175 = vadd.f32 %v173, %v174
    %v176 = vmul.f32 %v175, 0.125
    %v177 = vmul.f32 %v168, %v168
    %v178 = vsub.f32 %v176, %v177
    %v179 = vadd.f32 %v178, 0.8
    %v180 = vrsqrt.pop %v179
    %v181 = vmul.f32 %v38, %v180
    %v182 = vmul.f32 %v168, %v181
    %v183 = vsub.f32 %v39, %v182
    %v185 = vlaneseq
    %v186 = vshrl.u32 %v185, 7
    %v187 = vsub.s32 0, %v186
    %v188 = vrot.slane %v181, %v187
    %v190 = vmul.f32 %v159, %v188
    %v192 = vlaneseq
    %v193 = vshrl.u32 %v192, 7
    %v194 = vsub.s32 0, %v193
    %v195 = vrot.slane %v183, %v194
    %v197 = vadd.f32 %v190, %v195
    %vm198 = vcmp.ge.f32.partialorder %v197, 0.0
    %v199 = vmul.f32 %v197, 0.2
    %v200 = vsel %vm198, %v197, %v199
    %v201 = vrot.slane %v200, 4
    %v202 = vadd.f32 %v200, %v201
    %v203 = vrot.slane %v202, 2
    %v204 = vadd.f32 %v202, %v203
    %v205 = vrot.slane %v204, 1
    %v206 = vadd.f32 %v204, %v205
    %v207 = vmul.f32 %v206, 0.125
    %v208 = vmul.f32 %v200, %v200
    %v209 = vrot.slane %v208, 4
    %v210 = vadd.f32 %v208, %v209
    %v211 = vrot.slane %v210, 2
    %v212 = vadd.f32 %v210, %v211
    %v213 = vrot.slane %v212, 1
    %v214 = vadd.f32 %v212, %v213
    %v215 = vmul.f32 %v214, 0.125
    %v216 = vmul.f32 %v207, %v207
    %v217 = vsub.f32 %v215, %v216
    %v218 = vadd.f32 %v217, 0.8
    %v219 = vrsqrt.pop %v218
    %v220 = vmul.f32 %v38, %v219
    %v221 = vmul.f32 %v207, %v220
    %v222 = vsub.f32 %v39, %v221
    %v224 = vlaneseq
    %v225 = vshrl.u32 %v224, 7
    %v226 = vsub.s32 0, %v225
    %v227 = vrot.slane %v220, %v226
    %v229 = vmul.f32 %v200, %v227
    %v231 = vlaneseq
    %v232 = vshrl.u32 %v231, 7
    %v233 = vsub.s32 0, %v232
    %v234 = vrot.slane %v222, %v233
    %v236 = vadd.f32 %v229, %v234
    %237 = vst [vmem:[#allocation2] sm:$0xff] %v236
    // Predicated region
    $region22: #{tpu_custom_call.1} parent=1 // pred_check
      _
    $region23: #{tpu_custom_call.1} parent=1 // pred_check_branch
      %239 = sbr.rel (0) target = $region25
    $region24: #{tpu_custom_call.1} parent=1 // pred_region
      %s241 = ssub.s32 128, 128
      %242 = vsyncadd [#allocation3], %s241
      %s244 = sshll.u32 [#allocation2], 4
      %s245 = int_to_ptr.vmem [resolvable:$true] %s244
      %247 = dma.vmem_to_hbm [thread:$0]  %s245, 128, %s5, [#allocation3]
    $region25: #{tpu_custom_call.1} parent=1 // pred_fallthru
      _
    // Predicated region
    $region26: #{tpu_custom_call.1} parent=1 // pred_check
      _
    $region27: #{tpu_custom_call.1} parent=1 // pred_check_branch
      %249 = sbr.rel (0) target = $region29
    $region28: #{tpu_custom_call.1} parent=1 // pred_region
      %250 = dma.done [#allocation3], 128
    $region29: #{tpu_custom_call.1} parent=1 // pred_fallthru
      _
    %251 = vsyncpa [#allocation3], 1

</llo_original>
